<compile_context>
chip_gen: v6e
topology: v6e:2x2x1
jax: 0.10.0
libtpu: 0.0.40
codegen_flags: <defaults>
</compile_context>

<pallas_src>
import functools

import jax
import jax.numpy as jnp
from jax.experimental import pallas as pl
from jax.experimental.pallas import tpu as pltpu


def _vmem_limit(estimate_bytes):
    # Generous headroom over the double-buffered estimate, clamped so the
    # request is valid on every generation (v7x has 64 MiB physical).
    return int(min(48 * 1024 * 1024, max(8 * 1024 * 1024, 2 * estimate_bytes)))


# ---------------------------------------------------------------------------
# Kernel 1: per-batch channel mean, lane-dense layout.
# ---------------------------------------------------------------------------
def _channel_mean_kernel(x_ref, m_ref):
    # x_ref: (C, D*H*W) block in the input dtype; m_ref: (1, D*H*W) float32.
    m_ref[...] = jnp.mean(x_ref[...].astype(jnp.float32), axis=0, keepdims=True)


# ---------------------------------------------------------------------------
# Kernel 2: fused elementwise hot path (mul, Hardtanh(0,1), add, final mul).
# ---------------------------------------------------------------------------
def _siam_fused_kernel(xn_ref, xh_ref, xw_ref, qd_ref, pb_ref, pc_ref, o_ref,
                       *, c, d):
    # xn_ref: (C*D, H*W)  natural-order x rows (input dtype)
    # xh_ref: (C*D, H*W)  feature_h flat-order copy (input dtype)
    # xw_ref: (C*D, H*W)  feature_w flat-order copy (input dtype)
    # qd_ref: (1, H*W)    pre-scaled query_d (f32)
    # pb_ref: (D, H*W)    pre-scaled query_h broadcast pattern (row = n % D)
    # pc_ref: (D, H*W)    pre-scaled query_w broadcast pattern (row = n % D)
    # o_ref : (C*D, H*W)  output (input dtype)
    f32 = jnp.float32
    clip01 = lambda v: jnp.clip(v, 0.0, 1.0)          # Hardtanh(0, 1)

    xn = xn_ref[...].astype(f32)
    xh = xh_ref[...].astype(f32)
    xw = xw_ref[...].astype(f32)
    qd = qd_ref[...]                                  # (1, HW); hoisted once
    pb = jnp.tile(pb_ref[...], (c, 1))                # row n -> pattern row n % D
    pc = jnp.tile(pc_ref[...], (c, 1))

    # H- and W-slice attention maps: fully vectorized, already in output order.
    att_hw = clip01(xh * pb) + clip01(xw * pc)        # (C*D, HW)

    # D-slice map: output row n = k*C + m multiplies natural row m*D + k, so
    # for each k the C source rows are one stride-D sublane gather from the
    # resident block (no extra permuted HBM copy, no per-row ops).
    fd = jnp.concatenate(
        [xn_ref[pl.ds(k, c, stride=d), :].astype(f32) for k in range(d)],
        axis=0)                                       # (C*D, HW), output order

    # Single unmasked full-block store, cast back to the input dtype.
    o_ref[...] = ((clip01(fd * qd) + att_hw) * xn).astype(o_ref.dtype)


# ---------------------------------------------------------------------------
# Wrapper
# ---------------------------------------------------------------------------
def siam_forward(x):
    """SIAM forward.  x: (b, c, d, h, w).  Returns same shape and dtype."""
    b, c, d, h, w = x.shape
    hw = h * w
    cd = c * d
    dhw = d * h * w
    isz = x.dtype.itemsize

    # ---- Kernel 1: channel mean over lane-dense (C, D*H*W) blocks ----
    x_cm_view = x.reshape(b, c, dhw)                  # free view (no copy)
    m = pl.pallas_call(
        _channel_mean_kernel,
        out_shape=jax.ShapeDtypeStruct((b, 1, dhw), jnp.float32),
        grid=(b,),
        in_specs=[pl.BlockSpec((None, c, dhw), lambda i: (i, 0, 0))],
        out_specs=pl.BlockSpec((None, 1, dhw), lambda i: (i, 0, 0)),
        compiler_params=pltpu.CompilerParams(
            dimension_semantics=("parallel",),
            vmem_limit_bytes=_vmem_limit(2 * c * dhw * isz + 2 * dhw * 4)),
        cost_estimate=pl.CostEstimate(
            flops=b * c * dhw, transcendentals=0,
            bytes_accessed=b * c * dhw * isz + b * dhw * 4),
    )(x_cm_view)

    # ---- tiny wrapper-side reductions + index math (query-sized arrays) ----
    m4 = m.reshape(b, d, h, w)
    qd = m4.mean(axis=1) * (1.0 / d)                  # (b, h, w), /d folded in
    qh = m4.mean(axis=2) * (1.0 / h)                  # (b, d, w), /h folded in
    qw = m4.mean(axis=3) * (1.0 / w)                  # (b, d, h), /w folded in

    qd_flat = qd.reshape(b, 1, hw)

    # P_B[b, di, hi*w + wi] = qh[b, (di*h + hi) % d, wi]   (period-d in rows)
    idx_b = (jnp.arange(d)[:, None] * h + jnp.arange(h)[None, :]) % d     # (d,h)
    p_b = qh[:, idx_b, :].reshape(b, d, hw)

    # P_C[b, di, hi*w + wi] = qw[b, (f0 % (d*h)) // h, f0 % h],
    #   f0 = (di*h + hi)*w + wi                          (period-d in rows)
    f0 = ((jnp.arange(d)[:, None, None] * h
           + jnp.arange(h)[None, :, None]) * w
          + jnp.arange(w)[None, None, :])                                 # (d,h,w)
    p_c = qw[:, (f0 % (d * h)) // h, f0 % h].reshape(b, d, hw)

    # ---- x views: natural flat + the two reshape-view shuffles of PyTorch ----
    # TODO(synk): feature_h / feature_w shuffles stay as XLA transposed copies
    # (kept in the input dtype); Mosaic has no reliable general in-kernel
    # transpose of the two minor axes to fold them into the kernel.
    x_flat = x.reshape(b, cd, hw)
    xh_s = jnp.transpose(x, (0, 3, 1, 2, 4)).reshape(b, cd, hw)
    xw_s = jnp.transpose(x, (0, 4, 1, 2, 3)).reshape(b, cd, hw)

    # ---- Kernel 2: fused elementwise hot path ----
    big = cd * hw * isz
    out_flat = pl.pallas_call(
        functools.partial(_siam_fused_kernel, c=c, d=d),
        out_shape=jax.ShapeDtypeStruct((b, cd, hw), x.dtype),
        grid=(b,),
        in_specs=[
            pl.BlockSpec((None, cd, hw), lambda i: (i, 0, 0)),  # x natural flat
            pl.BlockSpec((None, cd, hw), lambda i: (i, 0, 0)),  # feature_h rows
            pl.BlockSpec((None, cd, hw), lambda i: (i, 0, 0)),  # feature_w rows
            pl.BlockSpec((None, 1, hw), lambda i: (i, 0, 0)),   # query_d
            pl.BlockSpec((None, d, hw), lambda i: (i, 0, 0)),   # P_B pattern
            pl.BlockSpec((None, d, hw), lambda i: (i, 0, 0)),   # P_C pattern
        ],
        out_specs=pl.BlockSpec((None, cd, hw), lambda i: (i, 0, 0)),
        compiler_params=pltpu.CompilerParams(
            dimension_semantics=("parallel",),
            vmem_limit_bytes=_vmem_limit(
                2 * 4 * big + 2 * (2 * d + 1) * hw * 4 + 4 * cd * hw * 4)),
        cost_estimate=pl.CostEstimate(
            flops=10 * b * cd * hw, transcendentals=0,
            bytes_accessed=4 * b * big + b * (2 * d + 1) * hw * 4),
    )(x_flat, xh_s, xw_s, qd_flat, p_b, p_c)

    return out_flat.reshape(b, c, d, h, w)


# ---------------------------------------------------------------------------
# Pure-JAX reference (faithful transcription of the PyTorch forward)
# ---------------------------------------------------------------------------
def siam_reference(x):
    b, c, d, h, w = x.shape
    m = x.mean(axis=1)                            # (b, d, h, w)
    qd = m.mean(axis=1, keepdims=True)            # (b, 1, h, w)
    qh = m.mean(axis=2, keepdims=True)            # (b, d, 1, w)
    qw = m.mean(axis=3, keepdims=True)            # (b, d, h, 1)
    fd = jnp.transpose(x, (0, 2, 1, 3, 4)).reshape(b, d * c, h, w)
    fh = jnp.transpose(x, (0, 3, 1, 2, 4)).reshape(b, h * c, d, w)
    fw = jnp.transpose(x, (0, 4, 1, 2, 3)).reshape(b, w * c, d, h)
    qh = jnp.transpose(qh, (0, 2, 1, 3))          # (b, 1, d, w)
    qw = jnp.transpose(qw, (0, 3, 1, 2))          # (b, 1, d, h)
    qd_e = jnp.broadcast_to(qd, (b, d * c, h, w))
    qh_e = jnp.broadcast_to(qh, (b, h * c, d, w))
    qw_e = jnp.broadcast_to(qw, (b, w * c, d, h))
    md = (fd * qd_e / d).reshape(b, c, d, h, w)
    mh = (fh * qh_e / h).reshape(b, c, d, h, w)
    mw = (fw * qw_e / w).reshape(b, c, d, h, w)
    relu1 = lambda v: jnp.clip(v, 0.0, 1.0)
    return (relu1(md) + relu1(mh) + relu1(mw)) * x


if __name__ == "__main__":
    # Primary small shape (b, c, d, h, w), float32.
    key = jax.random.PRNGKey(0)
    b, c, d, h, w = 2, 4, 8, 16, 16
    x = jax.random.normal(key, (b, c, d, h, w), dtype=jnp.float32)

    out = jax.block_until_ready(siam_forward(x))
    ref = siam_reference(x)
    assert out.shape == x.shape and out.dtype == x.dtype
    assert jnp.allclose(out, ref, rtol=1e-5, atol=1e-5), "f32 primary mismatch"

    # Generality check: c does not divide d, d not a multiple of 8, h != w.
    x2 = jax.random.normal(jax.random.PRNGKey(1), (1, 3, 5, 8, 16),
                           dtype=jnp.float32)
    out2 = jax.block_until_ready(siam_forward(x2))
    ref2 = siam_reference(x2)
    assert jnp.allclose(out2, ref2, rtol=1e-5, atol=1e-5), "odd-shape mismatch"

    # Input dtype is preserved end-to-end (HBM streams stay bf16, math in f32).
    xb = x.astype(jnp.bfloat16)
    outb = jax.block_until_ready(siam_forward(xb))
    refb = siam_reference(xb.astype(jnp.float32))
    assert outb.dtype == jnp.bfloat16
    assert jnp.allclose(outb.astype(jnp.float32), refb, rtol=2e-2, atol=2e-2), \
        "bf16 mismatch"

    print("KERNEL_OK")
</pallas_src>

<mosaic_0001>
module attributes {stable_mosaic.version = 11 : i64} {
  func.func @_channel_mean_kernel(%arg0: i32, %arg1: memref<1x4x2048xf32, #tpu.memory_space<vmem>>, %arg2: memref<1x1x2048xf32, #tpu.memory_space<vmem>>) attributes {dimension_semantics = [#tpu.dimension_semantics<parallel>], iteration_bounds = array<i64: 2>, scalar_prefetch = 0 : i64, scratch_operands = 0 : i64, tpu.core_type = #tpu.core_type<tc>, window_params = [{transform_indices = @transform_0, window_bounds = array<i64: 1, 4, 2048>}, {transform_indices = @transform_1, window_bounds = array<i64: 1, 1, 2048>}]} {
    %c0 = arith.constant 0 : index
    %c0_0 = arith.constant 0 : index
    %c0_1 = arith.constant 0 : index
    %0 = vector.load %arg1[%c0, %c0_0, %c0_1] : memref<1x4x2048xf32, #tpu.memory_space<vmem>>, vector<1x4x2048xf32>
    %1 = vector.shape_cast %0 : vector<1x4x2048xf32> to vector<4x2048xf32>
    %cst = arith.constant dense<0.000000e+00> : vector<2048xf32>
    %2 = vector.multi_reduction <add>, %1, %cst [0] : vector<4x2048xf32> to vector<2048xf32>
    %3 = vector.shape_cast %2 : vector<2048xf32> to vector<1x2048xf32>
    %cst_2 = arith.constant 4.000000e+00 : f32
    %4 = vector.broadcast %cst_2 : f32 to vector<1x2048xf32>
    %5 = arith.divf %3, %4 : vector<1x2048xf32>
    %c0_3 = arith.constant 0 : index
    %c0_4 = arith.constant 0 : index
    %c0_5 = arith.constant 0 : index
    %6 = vector.load %arg2[%c0_3, %c0_4, %c0_5] : memref<1x1x2048xf32, #tpu.memory_space<vmem>>, vector<1x1x2048xf32>
    %7 = vector.shape_cast %6 : vector<1x1x2048xf32> to vector<1x2048xf32>
    %8 = vector.shape_cast %5 : vector<1x2048xf32> to vector<1x1x2048xf32>
    tpu.vector_store %arg2[%c0_3, %c0_4, %c0_5], %8 {strides = array<i32>} : memref<1x1x2048xf32, #tpu.memory_space<vmem>>, vector<1x1x2048xf32>,
    return
  }
  func.func @transform_0(%arg0: i32) -> (i32, i32, i32) {
    %c0_i32 = arith.constant 0 : i32
    %c0_i32_0 = arith.constant 0 : i32
    %c0_i32_1 = arith.constant 0 : i32
    return %arg0, %c0_i32, %c0_i32_0 : i32, i32, i32
  }
  func.func @transform_1(%arg0: i32) -> (i32, i32, i32) {
    %c0_i32 = arith.constant 0 : i32
    %c0_i32_0 = arith.constant 0 : i32
    %c0_i32_1 = arith.constant 0 : i32
    return %arg0, %c0_i32, %c0_i32_0 : i32, i32, i32
  }
}

</mosaic_0001>

<llo_original>
// kernel: tpu_custom_call.1
$region0: #{tpu_custom_call.1}
  #allocation0 [shape = 'u32[]', space=smem, size = 0x4, offset = 0x4, fixed_abs, tag = 'smem constant byte address 0x4 - core index']
  #allocation1 [shape = 'u32[144,128]{1,0:T(1,128)}', space=vmem, size = 0x12000, scoped, tag = 'internal scratch']
  %s0 = inlined_call_operand.hbm [shape: f32[2,4,2048], index: 0, kind: input, shape index: {}]
  %s1 = inlined_call_operand.hbm [shape: f32[2,1,2048], index: 1, kind: output, shape index: {}]
  %s2 = sld [smem:[#allocation0]]
  $region41: #{tpu_custom_call.1} parent=0
    _
  %s4 = ssub.s32 1, %s2
  %s5 = scalar_select 0, %s4, %s2
  $region1: #{tpu_custom_call.1} parent=0
    #allocation2 [shape = 'u8[65536]{0}', space=vmem, size = 0x10000, scoped, tag = 'input window, operand 0']
    #allocation3 [shape = 's32[2]{0}', space=sflag, size = 0x8, scoped, tag = 'scoped memory for tpu_custom_call.1']
    #allocation4 [shape = 's32[2]{0}', space=sflag, size = 0x8, scoped, tag = 'scoped memory for tpu_custom_call.1']
    #allocation5 [shape = 'u8[16384]{0}', space=vmem, size = 0x4000, scoped, tag = 'output window, operand 0']
    %6 = vsyncpa [#allocation3], 0
    %s7 = scalar_lea.sflag [#allocation3], 1
    %8 = vsyncpa %s7, 0
    %9 = vsyncpa [#allocation4], 0
    %s10 = scalar_lea.sflag [#allocation4], 1
    %11 = vsyncpa %s10, 0
    loop: start=0, step=1, limit=4
    $region2: #{tpu_custom_call.1} parent=1 // loop_pre_header
      _
    $region3: #{tpu_custom_call.1} parent=1 // loop_header
      %s13 = sphi 0, %s17
      %p14 = scmp.ge.s32.totalorder %s13, 4
      %s23 = sphi 0, %s25
      %s26 = sphi 0, %s23
      %s27 = sphi 0, %s26
      %s43 = sphi 0, %s27
      %s49 = sphi 0, %s51
      %s52 = sphi 0, %s49
      %s53 = sphi 0, %s52
      %s69 = sphi 0, %s53
    $region4: #{tpu_custom_call.1} parent=1 // loop_header_branch
      %16 = sbr.rel (%p14) target = $region8
    $region5: #{tpu_custom_call.1} parent=1 // loop_body
      %s18 = ssub.s32 %s13, 1
      %s19 = ssub.s32 %s13, 2
      %s20 = sadd.s32 %s13, 1
      %s21 = ssub.s32 %s13, %s20
      %p22 = scmp.eq.s32.totalorder %s21, 0
      %s24 = sadd.s32 %s23, 1
      %s25 = scalar_select %p22, %s23, %s24
      %p28 = pneg %p22
      %p29 = scmp.eq.s32.totalorder %s13, 1
      %p30 = por %p28, %p29
      %p31 = scmp.ne.s32.totalorder %s23, %s26
      %p32 = scmp.eq.s32.totalorder %s13, 0
      %p33 = por %p31, %p32
      %p34 = scmp.ne.s32.totalorder %s23, %s26
      %p35 = scmp.eq.s32.totalorder %s18, 1
      %p36 = por %p34, %p35
      %p37 = scmp.ne.s32.totalorder %s26, %s27
      %p38 = scmp.eq.s32.totalorder %s18, 0
      %p39 = por %p37, %p38
      %p40 = scmp.ne.s32.totalorder %s26, %s27
      %p41 = scmp.eq.s32.totalorder %s19, 1
      %p42 = por %p40, %p41
      %p44 = scmp.ne.s32.totalorder %s27, %s43
      %p45 = scmp.eq.s32.totalorder %s19, 0
      %p46 = por %p44, %p45
      %s47 = ssub.s32 %s13, %s20
      %p48 = scmp.eq.s32.totalorder %s47, 0
      %s50 = sadd.s32 %s49, 1
      %s51 = scalar_select %p48, %s49, %s50
      %p54 = pneg %p48
      %p55 = scmp.eq.s32.totalorder %s13, 1
      %p56 = por %p54, %p55
      %p57 = scmp.ne.s32.totalorder %s49, %s52
      %p58 = scmp.eq.s32.totalorder %s13, 0
      %p59 = por %p57, %p58
      %p60 = scmp.ne.s32.totalorder %s49, %s52
      %p61 = scmp.eq.s32.totalorder %s18, 1
      %p62 = por %p60, %p61
      %p63 = scmp.ne.s32.totalorder %s52, %s53
      %p64 = scmp.eq.s32.totalorder %s18, 0
      %p65 = por %p63, %p64
      %p66 = scmp.ne.s32.totalorder %s52, %s53
      %p67 = scmp.eq.s32.totalorder %s19, 1
      %p68 = por %p66, %p67
      %p70 = scmp.ne.s32.totalorder %s53, %s69
      %p71 = scmp.eq.s32.totalorder %s19, 0
      %p72 = por %p70, %p71
      %p73 = scmp.le.s32.totalorder 1, %s13
      %p74 = scmp.lt.s32.totalorder %s13, 3
      %p75 = pnand %p73, %p74
      %p76 = pneg %p75
      // Predicated region
      $region9: #{tpu_custom_call.1} parent=5 // pred_check
        _
      $region10: #{tpu_custom_call.1} parent=5 // pred_check_branch
        %78 = sbr.rel (%p75) target = $region12
      $region11: #{tpu_custom_call.1} parent=5 // pred_region
        %s79 = ssub.s32 %s13, 1
      $region12: #{tpu_custom_call.1} parent=5 // pred_fallthru
        _
      %p80 = scmp.lt.s32.totalorder %s13, 2
      // Predicated region
      $region13: #{tpu_custom_call.1} parent=5 // pred_check
        %p81 = pneg %p80
      $region14: #{tpu_custom_call.1} parent=5 // pred_check_branch
        %83 = sbr.rel (%p81) target = $region16
      $region15: #{tpu_custom_call.1} parent=5 // pred_region
        // Predicated region
        $region17: #{tpu_custom_call.1} parent=15 // pred_check
          %p84 = pneg %p33
        $region18: #{tpu_custom_call.1} parent=15 // pred_check_branch
          %86 = sbr.rel (%p84) target = $region20
        $region19: #{tpu_custom_call.1} parent=15 // pred_region
          %s87 = sand.u32 %s23, 1
          %s88 = scalar_lea.sflag [#allocation3], %s87
          %s89 = sand.u32 %s23, 1
          %s90 = smul.addr %s89, 64
          %s91 = scalar_lea.vmem [#allocation2], %s90
          %s93 = ssub.s32 1024, 1024
          %94 = vsyncadd %s88, %s93
          %s95 = smul.addr %s13, 16
          %s96 = smul.addr %s95, 64
          %s97 = scalar_lea.hbm %s0, %s96
          %s99 = sshll.u32 %s91, 4
          %s100 = int_to_ptr.vmem [resolvable:$true] %s99
          %102 = dma.hbm_to_vmem [thread:$0]  %s97, 1024, %s100, %s88
        $region20: #{tpu_custom_call.1} parent=15 // pred_fallthru
          _
      $region16: #{tpu_custom_call.1} parent=5 // pred_fallthru
        _
      %p103 = scmp.le.s32.totalorder 1, %s13
      %p104 = scmp.lt.s32.totalorder %s13, 3
      %p105 = pnand %p103, %p104
      %p106 = pneg %p105
      // Predicated region
      $region21: #{tpu_custom_call.1} parent=5 // pred_check
        _
      $region22: #{tpu_custom_call.1} parent=5 // pred_check_branch
        %108 = sbr.rel (%p105) target = $region24
      $region23: #{tpu_custom_call.1} parent=5 // pred_region
        %s109 = ssub.s32 %s13, 1
        %s110 = sand.u32 %s26, 1
        %s111 = scalar_lea.sflag [#allocation3], %s110
        %s112 = sand.u32 %s26, 1
        %s113 = smul.addr %s112, 64
        %s114 = scalar_lea.vmem [#allocation2], %s113
        // Predicated region
        $region25: #{tpu_custom_call.1} parent=23 // pred_check
          %p115 = pneg %p39
        $region26: #{tpu_custom_call.1} parent=23 // pred_check_branch
          %117 = sbr.rel (%p115) target = $region28
        $region27: #{tpu_custom_call.1} parent=23 // pred_region
          %118 = dma.done %s111, 1024
        $region28: #{tpu_custom_call.1} parent=23 // pred_fallthru
          _
        %s119 = sand.u32 %s26, 1
        %s120 = scalar_lea.sflag [#allocation3], %s119
        %s121 = sand.u32 %s26, 1
        %s122 = smul.addr %s121, 64
        %s123 = scalar_lea.vmem [#allocation2], %s122
        %p124 = pneg %p39
        %p125 = pneg %p36
        %p126 = pneg %p65
        %p127 = pneg %p62
        %s128 = sand.u32 %s52, 1
        %s129 = scalar_lea.sflag [#allocation4], %s128
        %s130 = sand.u32 %s52, 1
        %s131 = smul.addr %s130, 16
        %s132 = scalar_lea.vmem [#allocation5], %s131
        %v133 = vld [vmem:[%s114] sm:$0xff]
        %v134 = vld [vmem:[%s114 + $0x8] sm:$0xff]
        %v135 = vld [vmem:[%s114 + $0x10] sm:$0xff]
        %v136 = vld [vmem:[%s114 + $0x18] sm:$0xff]
        %v137 = vld [vmem:[%s114 + $0x20] sm:$0xff]
        %v138 = vld [vmem:[%s114 + $0x28] sm:$0xff]
        %v139 = vld [vmem:[%s114 + $0x30] sm:$0xff]
        %v140 = vld [vmem:[%s114 + $0x38] sm:$0xff]
        %v149 = vcombine.high %v133, %v133
        %v150 = vcombine.high %v134, %v134
        %v151 = vcombine.high %v135, %v135
        %v152 = vcombine.high %v136, %v136
        %v153 = vcombine.high %v137, %v137
        %v154 = vcombine.high %v138, %v138
        %v155 = vcombine.high %v139, %v139
        %v156 = vcombine.high %v140, %v140
        %vm165 = vcmask 1043456
        %v166 = vsel %vm165, %v133, 0.0
        %v167 = vrot.slane %v166, 4
        %v168 = vadd.f32 %v166, %v167
        %v169 = vrot.slane %v168, 2
        %v170 = vadd.f32 %v168, %v169
        %v171 = vrot.slane %v170, 1
        %v172 = vadd.f32 %v170, %v171
        %v173 = vsel %vm165, %v149, 0.0
        %v174 = vrot.slane %v173, 4
        %v175 = vadd.f32 %v173, %v174
        %v176 = vrot.slane %v175, 2
        %v177 = vadd.f32 %v175, %v176
        %v178 = vrot.slane %v177, 1
        %v179 = vadd.f32 %v177, %v178
        %v180 = vsel %vm165, %v134, 0.0
        %v181 = vrot.slane %v180, 4
        %v182 = vadd.f32 %v180, %v181
        %v183 = vrot.slane %v182, 2
        %v184 = vadd.f32 %v182, %v183
        %v185 = vrot.slane %v184, 1
        %v186 = vadd.f32 %v184, %v185
        %v187 = vsel %vm165, %v150, 0.0
        %v188 = vrot.slane %v187, 4
        %v189 = vadd.f32 %v187, %v188
        %v190 = vrot.slane %v189, 2
        %v191 = vadd.f32 %v189, %v190
        %v192 = vrot.slane %v191, 1
        %v193 = vadd.f32 %v191, %v192
        %v194 = vsel %vm165, %v135, 0.0
        %v195 = vrot.slane %v194, 4
        %v196 = vadd.f32 %v194, %v195
        %v197 = vrot.slane %v196, 2
        %v198 = vadd.f32 %v196, %v197
        %v199 = vrot.slane %v198, 1
        %v200 = vadd.f32 %v198, %v199
        %v201 = vsel %vm165, %v151, 0.0
        %v202 = vrot.slane %v201, 4
        %v203 = vadd.f32 %v201, %v202
        %v204 = vrot.slane %v203, 2
        %v205 = vadd.f32 %v203, %v204
        %v206 = vrot.slane %v205, 1
        %v207 = vadd.f32 %v205, %v206
        %v208 = vsel %vm165, %v136, 0.0
        %v209 = vrot.slane %v208, 4
        %v210 = vadd.f32 %v208, %v209
        %v211 = vrot.slane %v210, 2
        %v212 = vadd.f32 %v210, %v211
        %v213 = vrot.slane %v212, 1
        %v214 = vadd.f32 %v212, %v213
        %v215 = vsel %vm165, %v152, 0.0
        %v216 = vrot.slane %v215, 4
        %v217 = vadd.f32 %v215, %v216
        %v218 = vrot.slane %v217, 2
        %v219 = vadd.f32 %v217, %v218
        %v220 = vrot.slane %v219, 1
        %v221 = vadd.f32 %v219, %v220
        %v222 = vsel %vm165, %v137, 0.0
        %v223 = vrot.slane %v222, 4
        %v224 = vadd.f32 %v222, %v223
        %v225 = vrot.slane %v224, 2
        %v226 = vadd.f32 %v224, %v225
        %v227 = vrot.slane %v226, 1
        %v228 = vadd.f32 %v226, %v227
        %v229 = vsel %vm165, %v153, 0.0
        %v230 = vrot.slane %v229, 4
        %v231 = vadd.f32 %v229, %v230
        %v232 = vrot.slane %v231, 2
        %v233 = vadd.f32 %v231, %v232
        %v234 = vrot.slane %v233, 1
        %v235 = vadd.f32 %v233, %v234
        %v236 = vsel %vm165, %v138, 0.0
        %v237 = vrot.slane %v236, 4
        %v238 = vadd.f32 %v236, %v237
        %v239 = vrot.slane %v238, 2
        %v240 = vadd.f32 %v238, %v239
        %v241 = vrot.slane %v240, 1
        %v242 = vadd.f32 %v240, %v241
        %v243 = vsel %vm165, %v154, 0.0
        %v244 = vrot.slane %v243, 4
        %v245 = vadd.f32 %v243, %v244
        %v246 = vrot.slane %v245, 2
        %v247 = vadd.f32 %v245, %v246
        %v248 = vrot.slane %v247, 1
        %v249 = vadd.f32 %v247, %v248
        %v250 = vsel %vm165, %v139, 0.0
        %v251 = vrot.slane %v250, 4
        %v252 = vadd.f32 %v250, %v251
        %v253 = vrot.slane %v252, 2
        %v254 = vadd.f32 %v252, %v253
        %v255 = vrot.slane %v254, 1
        %v256 = vadd.f32 %v254, %v255
        %v257 = vsel %vm165, %v155, 0.0
        %v258 = vrot.slane %v257, 4
        %v259 = vadd.f32 %v257, %v258
        %v260 = vrot.slane %v259, 2
        %v261 = vadd.f32 %v259, %v260
        %v262 = vrot.slane %v261, 1
        %v263 = vadd.f32 %v261, %v262
        %v264 = vsel %vm165, %v140, 0.0
        %v265 = vrot.slane %v264, 4
        %v266 = vadd.f32 %v264, %v265
        %v267 = vrot.slane %v266, 2
        %v268 = vadd.f32 %v266, %v267
        %v269 = vrot.slane %v268, 1
        %v270 = vadd.f32 %v268, %v269
        %v271 = vsel %vm165, %v156, 0.0
        %v272 = vrot.slane %v271, 4
        %v273 = vadd.f32 %v271, %v272
        %v274 = vrot.slane %v273, 2
        %v275 = vadd.f32 %v273, %v274
        %v276 = vrot.slane %v275, 1
        %v277 = vadd.f32 %v275, %v276
        %v278 = vrcp.pop 4.0
        %v279 = vmul.f32 %v172, %v278
        %v280 = vmul.f32 %v179, %v278
        %v281 = vmul.f32 %v186, %v278
        %v282 = vmul.f32 %v193, %v278
        %v283 = vmul.f32 %v200, %v278
        %v284 = vmul.f32 %v207, %v278
        %v285 = vmul.f32 %v214, %v278
        %v286 = vmul.f32 %v221, %v278
        %v287 = vmul.f32 %v228, %v278
        %v288 = vmul.f32 %v235, %v278
        %v289 = vmul.f32 %v242, %v278
        %v290 = vmul.f32 %v249, %v278
        %v291 = vmul.f32 %v256, %v278
        %v292 = vmul.f32 %v263, %v278
        %v293 = vmul.f32 %v270, %v278
        %v294 = vmul.f32 %v277, %v278
        %v311 = vcombine.low %v279, %v280
        %v312 = vcombine.low %v281, %v282
        %v313 = vcombine.low %v283, %v284
        %v314 = vcombine.low %v285, %v286
        %v316 = vunpack.c.l.s4 1966171168
        %v317 = vunpack.c.0.s8 %v316
        %v318 = vlaneseq
        %v319 = vshrl.u32 %v318, 7
        %v320 = vsub.s32 %v317, %v319
        %v321 = vrot.slane %v311, %v320
        %v323 = vunpack.c.l.s4 1966171168
        %v324 = vunpack.c.0.s8 %v323
        %v325 = vlaneseq
        %v326 = vshrl.u32 %v325, 7
        %v327 = vsub.s32 %v324, %v326
        %v328 = vrot.slane %v312, %v327
        %v330 = vunpack.c.l.s4 1966171168
        %v331 = vunpack.c.0.s8 %v330
        %v332 = vlaneseq
        %v333 = vshrl.u32 %v332, 7
        %v334 = vsub.s32 %v331, %v333
        %v335 = vrot.slane %v313, %v334
        %v337 = vunpack.c.l.s4 1966171168
        %v338 = vunpack.c.0.s8 %v337
        %v339 = vlaneseq
        %v340 = vshrl.u32 %v339, 7
        %v341 = vsub.s32 %v338, %v340
        %v342 = vrot.slane %v314, %v341
        %v343 = vcombine.low %v321, %v328
        %v344 = vcombine.low %v335, %v342
        %v346 = vunpack.c.l.s4 1966171168
        %v347 = vunpack.c.0.s8 %v346
        %v348 = vlaneseq
        %v349 = vshrl.u32 %v348, 7
        %v350 = vsub.s32 %v347, %v349
        %v351 = vrot.slane %v343, %v350
        %v353 = vunpack.c.l.s4 1966171168
        %v354 = vunpack.c.0.s8 %v353
        %v355 = vlaneseq
        %v356 = vshrl.u32 %v355, 7
        %v357 = vsub.s32 %v354, %v356
        %v358 = vrot.slane %v344, %v357
        %v359 = vcombine.low %v351, %v358
        %v360 = vcombine.low %v287, %v288
        %v361 = vcombine.low %v289, %v290
        %v362 = vcombine.low %v291, %v292
        %v363 = vcombine.low %v293, %v294
        %v365 = vunpack.c.l.s4 1966171168
        %v366 = vunpack.c.0.s8 %v365
        %v367 = vlaneseq
        %v368 = vshrl.u32 %v367, 7
        %v369 = vsub.s32 %v366, %v368
        %v370 = vrot.slane %v360, %v369
        %v372 = vunpack.c.l.s4 1966171168
        %v373 = vunpack.c.0.s8 %v372
        %v374 = vlaneseq
        %v375 = vshrl.u32 %v374, 7
        %v376 = vsub.s32 %v373, %v375
        %v377 = vrot.slane %v361, %v376
        %v379 = vunpack.c.l.s4 1966171168
        %v380 = vunpack.c.0.s8 %v379
        %v381 = vlaneseq
        %v382 = vshrl.u32 %v381, 7
        %v383 = vsub.s32 %v380, %v382
        %v384 = vrot.slane %v362, %v383
        %v386 = vunpack.c.l.s4 1966171168
        %v387 = vunpack.c.0.s8 %v386
        %v388 = vlaneseq
        %v389 = vshrl.u32 %v388, 7
        %v390 = vsub.s32 %v387, %v389
        %v391 = vrot.slane %v363, %v390
        %v392 = vcombine.low %v370, %v377
        %v393 = vcombine.low %v384, %v391
        %v395 = vunpack.c.l.s4 1966171168
        %v396 = vunpack.c.0.s8 %v395
        %v397 = vlaneseq
        %v398 = vshrl.u32 %v397, 7
        %v399 = vsub.s32 %v396, %v398
        %v400 = vrot.slane %v392, %v399
        %v402 = vunpack.c.l.s4 1966171168
        %v403 = vunpack.c.0.s8 %v402
        %v404 = vlaneseq
        %v405 = vshrl.u32 %v404, 7
        %v406 = vsub.s32 %v403, %v405
        %v407 = vrot.slane %v393, %v406
        %v408 = vcombine.low %v400, %v407
        %411 = vst [vmem:[%s132] sm:$0xff] %v359
        %412 = vst [vmem:[%s132 + $0x8] sm:$0xff] %v408
        %s413 = sand.u32 %s52, 1
        %s414 = scalar_lea.sflag [#allocation4], %s413
        %s415 = sand.u32 %s52, 1
        %s416 = smul.addr %s415, 16
        %s417 = scalar_lea.vmem [#allocation5], %s416
        // Predicated region
        $region29: #{tpu_custom_call.1} parent=23 // pred_check
          %p418 = pneg %p62
        $region30: #{tpu_custom_call.1} parent=23 // pred_check_branch
          %420 = sbr.rel (%p418) target = $region32
        $region31: #{tpu_custom_call.1} parent=23 // pred_region
          %s422 = ssub.s32 256, 256
          %423 = vsyncadd %s414, %s422
          %s424 = smul.addr %s18, 16
          %s425 = smul.addr %s424, 16
          %s426 = scalar_lea.hbm %s1, %s425
          %s428 = sshll.u32 %s417, 4
          %s429 = int_to_ptr.vmem [resolvable:$true] %s428
          %431 = dma.vmem_to_hbm [thread:$0]  %s429, 256, %s426, %s414
        $region32: #{tpu_custom_call.1} parent=23 // pred_fallthru
          _
      $region24: #{tpu_custom_call.1} parent=5 // pred_fallthru
        _
      %p432 = scmp.le.s32.totalorder 2, %s13
      // Predicated region
      $region33: #{tpu_custom_call.1} parent=5 // pred_check
        %p433 = pneg %p432
      $region34: #{tpu_custom_call.1} parent=5 // pred_check_branch
        %435 = sbr.rel (%p433) target = $region36
      $region35: #{tpu_custom_call.1} parent=5 // pred_region
        %s436 = ssub.s32 %s13, 2
        // Predicated region
        $region37: #{tpu_custom_call.1} parent=35 // pred_check
          %p437 = pneg %p68
        $region38: #{tpu_custom_call.1} parent=35 // pred_check_branch
          %439 = sbr.rel (%p437) target = $region40
        $region39: #{tpu_custom_call.1} parent=35 // pred_region
          %s440 = sand.u32 %s53, 1
          %s441 = scalar_lea.sflag [#allocation4], %s440
          %s442 = sand.u32 %s53, 1
          %s443 = smul.addr %s442, 16
          %s444 = scalar_lea.vmem [#allocation5], %s443
          %445 = dma.done %s441, 256
        $region40: #{tpu_custom_call.1} parent=35 // pred_fallthru
          _
      $region36: #{tpu_custom_call.1} parent=5 // pred_fallthru
        _
    $region6: #{tpu_custom_call.1} parent=1 // loop_footer
      %s17 = sadd.s32 1, %s13
    $region7: #{tpu_custom_call.1} parent=1 // loop_footer_branch
      %12 = sbr.rel target = $region3
    $region8: #{tpu_custom_call.1} parent=1 // loop_exit
      _
    %446 = vsyncpa [#allocation3], 1
    %s447 = scalar_lea.sflag [#allocation3], 1
    %448 = vsyncpa %s447, 1
    %449 = vsyncpa [#allocation4], 1
    %s450 = scalar_lea.sflag [#allocation4], 1
    %451 = vsyncpa %s450, 1

</llo_original>
